<compile_context>
chip_gen: v5e
topology: v5e:2x2
jax: 0.10.0
libtpu: 0.0.40
codegen_flags: <defaults>
</compile_context>

<pallas_src>
import functools

import jax
import jax.numpy as jnp
from jax.experimental import pallas as pl
from jax.experimental.pallas import tpu as pltpu

LN_EPS = 1e-12  # BERT LayerNorm eps


def _image_bert_embeddings_kernel(
    img_ref,      # (BB*N, IMG_H) f32   image features
    ids_ref,      # (BB*S, 1)     int32 token type ids
    w_ref,        # (IMG_H, H)    matmul dtype  img_embeddings weight^T
    rowadd_ref,   # (N, H)        f32   img bias + pos_emb[1:1+N]
    cls_ref,      # (1, H)        f32   word_emb[cls] + pos_emb[0]
    sep_ref,      # (1, H)        f32   word_emb[sep] + pos_emb[S-1]
    tt_ref,       # (T, H)        f32   token_type_embeddings table
    gamma_ref,    # (1, H)        f32   LayerNorm weight
    beta_ref,     # (1, H)        f32   LayerNorm bias
    out_ref,      # (BB*S, H)     out dtype
    x_ref,        # (BB*S, H)     f32 VMEM scratch (pre-LN values)
    *,
    num_image_embeds: int,
    batch_block: int,
    n_types: int,
    matmul_dtype,
):
    n = num_image_embeds
    bb = batch_block
    s = n + 2
    h = out_ref.shape[-1]

    # ---- image projection: single (BB*N, IMG_H) @ (IMG_H, H) matmul on the
    # MXU.  Cast to the MXU-native dtype *inside* the kernel (no extra HBM
    # pass for the cast).
    imgs = img_ref[...].astype(matmul_dtype)
    proj = jnp.dot(imgs, w_ref[...], preferred_element_type=jnp.float32)

    rowadd = rowadd_ref[...]          # (N, H) bias + image-position embeddings
    cls_row = cls_ref[...]            # (1, H) cls embedding + pos[0]
    sep_row = sep_ref[...]            # (1, H) sep embedding + pos[S-1]

    # ---- stage pre-LN values straight into the (BB*S, H) scratch (bias/pos
    # adds folded into the staging writes; static unroll over the batch tile).
    for b in range(bb):
        base = b * s
        x_ref[pl.ds(base, 1), :] = cls_row
        x_ref[pl.ds(base + 1, n), :] = proj[b * n:(b + 1) * n, :] + rowadd
        x_ref[pl.ds(base + 1 + n, 1), :] = sep_row

    # ---- token-type embedding: in-VMEM select from the tiny (T, H) table.
    ids = ids_ref[...]                                          # (BB*S, 1) int32
    if n_types == 2:
        row0 = jnp.broadcast_to(tt_ref[0:1, :], (bb * s, h))
        row1 = jnp.broadcast_to(tt_ref[1:2, :], (bb * s, h))
        tt = jnp.where(ids == 0, row0, row1)
    else:
        # Generic fallback.  NOTE: ids >= n_types get a zero embedding here,
        # whereas jnp.take in the reference clips; only differs for invalid ids.
        tt = jnp.zeros((bb * s, h), jnp.float32)
        for t in range(n_types):
            tt = tt + (ids == t).astype(jnp.float32) * jnp.broadcast_to(
                tt_ref[t:t + 1, :], (bb * s, h))

    # ---- ONE scratch read + ONE LayerNorm pass + ONE dense full-tile store.
    x = x_ref[...] + tt                                         # (BB*S, H) f32
    mean = jnp.mean(x, axis=-1, keepdims=True)
    cen = x - mean
    var = jnp.mean(cen * cen, axis=-1, keepdims=True)
    y = cen * jax.lax.rsqrt(var + LN_EPS)
    y = y * gamma_ref[...] + beta_ref[...]
    out_ref[...] = y.astype(out_ref.dtype)

    # TODO(synk): nn.Dropout is stochastic at train time; it is the identity
    # in eval mode, which is what we reproduce here.


def _pick_batch_block(B, N, S, IMG_H, H, *, mm_itemsize, out_itemsize, n_types,
                      vmem_budget_bytes=24 << 20, max_block_rows=4096):
    """VMEM-budget-driven batch tile: largest divisor of B whose working set
    (double-buffered imgs/ids/out tiles + f32 scratch + resident params) fits
    the budget, preferring an even grid length (v7x has 2 TensorCores)."""
    resident = 2 * (IMG_H * H * mm_itemsize + (N + 4 + n_types) * H * 4)

    def workset(bb):
        return (2 * bb * N * IMG_H * 4          # imgs tiles (f32, 2 buffers)
                + 2 * bb * S * 512              # int32 ids tiles (lane-padded)
                + 2 * bb * S * H * out_itemsize # out tiles (2 buffers)
                + bb * S * H * 4)               # f32 scratch

    cands = []
    for d in range(1, B + 1):
        if B % d:
            continue
        # (8,128) rule: sub-full blocks need sublane-multiple-of-8 row counts.
        shape_ok = (d == B) or ((d * N) % 8 == 0 and (d * S) % 8 == 0)
        if (shape_ok and d * S <= max_block_rows
                and workset(d) + resident <= vmem_budget_bytes):
            cands.append(d)
    if not cands:
        return B
    best = max(cands)
    if (B // best) % 2 == 1:                    # prefer even grid for v7x
        even = [d for d in cands if (B // d) % 2 == 0]
        if even and 2 * max(even) >= best:
            best = max(even)
    return best


def _vmem_limit_bytes(bb, N, S, IMG_H, H, mm_itemsize, out_itemsize, n_types):
    resident = 2 * (IMG_H * H * mm_itemsize + (N + 4 + n_types) * H * 4)
    ws = (2 * bb * N * IMG_H * 4 + 2 * bb * S * 512
          + 2 * bb * S * H * out_itemsize + bb * S * H * 4)
    return int(max(ws + resident + (2 << 20), 32 << 20))


def prepare_params(params, *, cls_token_id, sep_token_id, num_image_embeds,
                   matmul_dtype=jnp.bfloat16):
    """One-time parameter massaging (do this at model init, not per step)."""
    N = num_image_embeds
    S = N + 2
    H = params["img_w"].shape[0]                 # PyTorch Linear weight: (H, IMG_H)
    pos = params["pos_emb"][:S].astype(jnp.float32)                 # (S, H)
    return {
        "w_t": params["img_w"].T.astype(matmul_dtype),              # (IMG_H, H)
        "rowadd": params["img_b"].astype(jnp.float32)[None, :] + pos[1:1 + N],
        "cls_row": (params["word_emb"][cls_token_id].astype(jnp.float32)
                    + pos[0]).reshape(1, H),
        "sep_row": (params["word_emb"][sep_token_id].astype(jnp.float32)
                    + pos[S - 1]).reshape(1, H),
        "tt": params["tok_type_emb"].astype(jnp.float32),            # (T, H)
        "gamma": params["ln_gamma"].reshape(1, H).astype(jnp.float32),
        "beta": params["ln_beta"].reshape(1, H).astype(jnp.float32),
    }


def image_bert_embeddings(input_imgs, token_type_ids, prep, *,
                          out_dtype=jnp.float32, batch_block=None,
                          vmem_budget_bytes=24 << 20):
    B, N, IMG_H = input_imgs.shape
    S = N + 2
    img_h_w, H = prep["w_t"].shape
    assert img_h_w == IMG_H
    n_types = prep["tt"].shape[0]
    assert token_type_ids.shape == (B, S)

    mm_dtype = jnp.dtype(prep["w_t"].dtype)
    out_dtype = jnp.dtype(out_dtype)

    if batch_block is None:
        batch_block = _pick_batch_block(
            B, N, S, IMG_H, H, mm_itemsize=mm_dtype.itemsize,
            out_itemsize=out_dtype.itemsize, n_types=n_types,
            vmem_budget_bytes=vmem_budget_bytes)
    assert B % batch_block == 0
    grid = (B // batch_block,)

    # Flat 2D activation layouts; contiguous reshapes are free (no data move).
    # NOTE: no dtype cast here -- the bf16 cast happens inside the kernel.
    imgs2 = input_imgs.reshape(B * N, IMG_H)
    ids2 = token_type_ids.astype(jnp.int32).reshape(B * S, 1)

    kernel = functools.partial(
        _image_bert_embeddings_kernel,
        num_image_embeds=N, batch_block=batch_block, n_types=n_types,
        matmul_dtype=mm_dtype)

    flops = 2 * B * N * IMG_H * H
    bytes_accessed = int(
        imgs2.size * imgs2.dtype.itemsize
        + ids2.size * 4
        + prep["w_t"].size * mm_dtype.itemsize
        + (prep["rowadd"].size + prep["cls_row"].size + prep["sep_row"].size
           + prep["tt"].size + prep["gamma"].size + prep["beta"].size) * 4
        + B * S * H * out_dtype.itemsize)

    # TODO(synk): on v7x, pipeline_mode=pl.Buffered(1) on the grid-invariant
    # operand specs below would free VMEM for a larger batch tile.
    out2 = pl.pallas_call(
        kernel,
        out_shape=jax.ShapeDtypeStruct((B * S, H), out_dtype),
        grid_spec=pltpu.PrefetchScalarGridSpec(
            num_scalar_prefetch=0,
            grid=grid,
            in_specs=[
                pl.BlockSpec((batch_block * N, IMG_H), lambda i: (i, 0)),  # imgs
                pl.BlockSpec((batch_block * S, 1), lambda i: (i, 0)),      # ids
                pl.BlockSpec((IMG_H, H), lambda i: (0, 0)),                # W^T
                pl.BlockSpec((N, H), lambda i: (0, 0)),                    # bias+pos
                pl.BlockSpec((1, H), lambda i: (0, 0)),                    # cls+pos0
                pl.BlockSpec((1, H), lambda i: (0, 0)),                    # sep+posS-1
                pl.BlockSpec((n_types, H), lambda i: (0, 0)),              # tt table
                pl.BlockSpec((1, H), lambda i: (0, 0)),                    # gamma
                pl.BlockSpec((1, H), lambda i: (0, 0)),                    # beta
            ],
            out_specs=pl.BlockSpec((batch_block * S, H), lambda i: (i, 0)),
            scratch_shapes=[pltpu.VMEM((batch_block * S, H), jnp.float32)],
        ),
        compiler_params=pltpu.CompilerParams(
            dimension_semantics=("parallel",),
            vmem_limit_bytes=_vmem_limit_bytes(
                batch_block, N, S, IMG_H, H,
                mm_dtype.itemsize, out_dtype.itemsize, n_types),
        ),
        cost_estimate=pl.CostEstimate(
            flops=flops, transcendentals=0, bytes_accessed=bytes_accessed),
    )(imgs2, ids2, prep["w_t"], prep["rowadd"], prep["cls_row"],
      prep["sep_row"], prep["tt"], prep["gamma"], prep["beta"])

    return out2.reshape(B, S, H)


def reference(input_imgs, token_type_ids, params, *, cls_token_id, sep_token_id):
    """Pure-JAX reference matching the PyTorch forward (eval mode)."""
    B, N, IMG_H = input_imgs.shape
    S = N + 2
    H = params["img_w"].shape[0]
    imgs_emb = jnp.einsum("bnk,hk->bnh", input_imgs, params["img_w"]) + params["img_b"]
    cls = jnp.broadcast_to(params["word_emb"][cls_token_id], (B, 1, H))
    sep = jnp.broadcast_to(params["word_emb"][sep_token_id], (B, 1, H))
    tok = jnp.concatenate([cls, imgs_emb, sep], axis=1)
    pos = params["pos_emb"][:S][None]
    tt = jnp.take(params["tok_type_emb"], token_type_ids, axis=0)
    x = tok + pos + tt
    mean = jnp.mean(x, -1, keepdims=True)
    var = jnp.mean((x - mean) ** 2, -1, keepdims=True)
    xn = (x - mean) * jax.lax.rsqrt(var + LN_EPS)
    return xn * params["ln_gamma"] + params["ln_beta"]


if __name__ == "__main__":
    # Small config consistent with the module:
    #   img_hidden_sz=64, hidden_sz=32, num_image_embeds=6 -> seq_length=8
    B, N, IMG_H, H = 2, 6, 64, 32
    S = N + 2
    VOCAB, MAX_POS, N_TYPES = 32, 16, 2
    CLS_ID, SEP_ID = 1, 2

    key = jax.random.PRNGKey(0)
    ks = jax.random.split(key, 8)
    params = {
        "img_w": jax.random.normal(ks[0], (H, IMG_H), jnp.float32) * 0.02,
        "img_b": jax.random.normal(ks[1], (H,), jnp.float32) * 0.02,
        "word_emb": jax.random.normal(ks[2], (VOCAB, H), jnp.float32) * 0.02,
        "pos_emb": jax.random.normal(ks[3], (MAX_POS, H), jnp.float32) * 0.02,
        "tok_type_emb": jax.random.normal(ks[4], (N_TYPES, H), jnp.float32) * 0.02,
        "ln_gamma": jnp.ones((H,), jnp.float32),
        "ln_beta": jnp.zeros((H,), jnp.float32),
    }

    input_imgs = jax.random.normal(ks[5], (B, N, IMG_H), jnp.float32)
    # token type ids in {0, 1}: image segment zeros, final sep token type 1.
    token_type_ids = jnp.zeros((B, S), jnp.int32).at[:, S - 1].set(1)

    ref = reference(
        input_imgs, token_type_ids, params,
        cls_token_id=CLS_ID, sep_token_id=SEP_ID,
    )

    # f32 matmul operands.
    prep_f32 = prepare_params(
        params, cls_token_id=CLS_ID, sep_token_id=SEP_ID,
        num_image_embeds=N, matmul_dtype=jnp.float32)
    out_f32 = image_bert_embeddings(input_imgs, token_type_ids, prep_f32)
    out_f32 = jax.block_until_ready(out_f32)
    assert out_f32.shape == (B, S, H)
    # MXU pass count for f32 may differ from the XLA reference -> modest tol.
    assert jnp.allclose(out_f32, ref, atol=1e-2, rtol=1e-2), "f32 mismatch vs reference"

    # bf16 matmul operands (MXU-native on all generations): looser tolerance.
    prep_bf16 = prepare_params(
        params, cls_token_id=CLS_ID, sep_token_id=SEP_ID,
        num_image_embeds=N, matmul_dtype=jnp.bfloat16)
    out_bf16 = image_bert_embeddings(input_imgs, token_type_ids, prep_bf16)
    out_bf16 = jax.block_until_ready(out_bf16)
    assert out_bf16.shape == (B, S, H)
    assert jnp.allclose(out_bf16, ref, atol=5e-2, rtol=5e-2), "bf16 mismatch vs reference"

    print("KERNEL_OK")
</pallas_src>

<mosaic_0001>
module attributes {stable_mosaic.version = 11 : i64} {
  func.func @_image_bert_embeddings_kernel(%arg0: i32, %arg1: memref<12x64xf32, #tpu.memory_space<vmem>>, %arg2: memref<16x1xi32, #tpu.memory_space<vmem>>, %arg3: memref<64x32xf32, #tpu.memory_space<vmem>>, %arg4: memref<6x32xf32, #tpu.memory_space<vmem>>, %arg5: memref<1x32xf32, #tpu.memory_space<vmem>>, %arg6: memref<1x32xf32, #tpu.memory_space<vmem>>, %arg7: memref<2x32xf32, #tpu.memory_space<vmem>>, %arg8: memref<1x32xf32, #tpu.memory_space<vmem>>, %arg9: memref<1x32xf32, #tpu.memory_space<vmem>>, %arg10: memref<16x32xf32, #tpu.memory_space<vmem>>, %arg11: memref<16x32xf32, #tpu.memory_space<vmem>>) attributes {dimension_semantics = [#tpu.dimension_semantics<parallel>], iteration_bounds = array<i64: 1>, scalar_prefetch = 0 : i64, scratch_operands = 1 : i64, tpu.core_type = #tpu.core_type<tc>, window_params = [{transform_indices = @transform_0, window_bounds = array<i64: 12, 64>}, {transform_indices = @transform_1, window_bounds = array<i64: 16, 1>}, {pipeline_mode = #tpu.pipeline_mode<synchronous>, transform_indices = @transform_2, window_bounds = array<i64: 64, 32>}, {pipeline_mode = #tpu.pipeline_mode<synchronous>, transform_indices = @transform_3, window_bounds = array<i64: 6, 32>}, {pipeline_mode = #tpu.pipeline_mode<synchronous>, transform_indices = @transform_4, window_bounds = array<i64: 1, 32>}, {pipeline_mode = #tpu.pipeline_mode<synchronous>, transform_indices = @transform_5, window_bounds = array<i64: 1, 32>}, {pipeline_mode = #tpu.pipeline_mode<synchronous>, transform_indices = @transform_6, window_bounds = array<i64: 2, 32>}, {pipeline_mode = #tpu.pipeline_mode<synchronous>, transform_indices = @transform_7, window_bounds = array<i64: 1, 32>}, {pipeline_mode = #tpu.pipeline_mode<synchronous>, transform_indices = @transform_8, window_bounds = array<i64: 1, 32>}, {transform_indices = @transform_9, window_bounds = array<i64: 16, 32>}]} {
    %c0 = arith.constant 0 : index
    %c0_0 = arith.constant 0 : index
    %0 = vector.load %arg1[%c0, %c0_0] : memref<12x64xf32, #tpu.memory_space<vmem>>, vector<12x64xf32>
    %c0_1 = arith.constant 0 : index
    %c0_2 = arith.constant 0 : index
    %1 = vector.load %arg3[%c0_1, %c0_2] : memref<64x32xf32, #tpu.memory_space<vmem>>, vector<64x32xf32>
    %cst = arith.constant dense<0.000000e+00> : vector<12x32xf32>
    %2 = tpu.matmul %0, %1, %cst {dimension_numbers = #tpu.dot_dimension_numbers<[1], [0], [0], [1], [0, 0, 1, 1], [], []>} : vector<12x64xf32>, vector<64x32xf32>, vector<12x32xf32> -> vector<12x32xf32>
    %c0_3 = arith.constant 0 : index
    %c0_4 = arith.constant 0 : index
    %3 = vector.load %arg4[%c0_3, %c0_4] : memref<6x32xf32, #tpu.memory_space<vmem>>, vector<6x32xf32>
    %c0_5 = arith.constant 0 : index
    %c0_6 = arith.constant 0 : index
    %4 = vector.load %arg5[%c0_5, %c0_6] : memref<1x32xf32, #tpu.memory_space<vmem>>, vector<1x32xf32>
    %c0_7 = arith.constant 0 : index
    %c0_8 = arith.constant 0 : index
    %5 = vector.load %arg6[%c0_7, %c0_8] : memref<1x32xf32, #tpu.memory_space<vmem>>, vector<1x32xf32>
    %c0_9 = arith.constant 0 : index
    %c0_10 = arith.constant 0 : index
    %6 = vector.load %arg11[%c0_9, %c0_10] : memref<16x32xf32, #tpu.memory_space<vmem>>, vector<1x32xf32>
    tpu.vector_store %arg11[%c0_9, %c0_10], %4 {strides = array<i32>} : memref<16x32xf32, #tpu.memory_space<vmem>>, vector<1x32xf32>,
    %7 = vector.extract_strided_slice %2 {offsets = [0, 0], sizes = [6, 32], strides = [1, 1]} : vector<12x32xf32> to vector<6x32xf32>
    %8 = arith.addf %7, %3 : vector<6x32xf32>
    %c1 = arith.constant 1 : index
    %c0_11 = arith.constant 0 : index
    %9 = vector.load %arg11[%c1, %c0_11] : memref<16x32xf32, #tpu.memory_space<vmem>>, vector<6x32xf32>
    tpu.vector_store %arg11[%c1, %c0_11], %8 {strides = array<i32>} : memref<16x32xf32, #tpu.memory_space<vmem>>, vector<6x32xf32>,
    %c7 = arith.constant 7 : index
    %c0_12 = arith.constant 0 : index
    %10 = vector.load %arg11[%c7, %c0_12] : memref<16x32xf32, #tpu.memory_space<vmem>>, vector<1x32xf32>
    tpu.vector_store %arg11[%c7, %c0_12], %5 {strides = array<i32>} : memref<16x32xf32, #tpu.memory_space<vmem>>, vector<1x32xf32>,
    %c8 = arith.constant 8 : index
    %c0_13 = arith.constant 0 : index
    %11 = vector.load %arg11[%c8, %c0_13] : memref<16x32xf32, #tpu.memory_space<vmem>>, vector<1x32xf32>
    tpu.vector_store %arg11[%c8, %c0_13], %4 {strides = array<i32>} : memref<16x32xf32, #tpu.memory_space<vmem>>, vector<1x32xf32>,
    %12 = vector.extract_strided_slice %2 {offsets = [6, 0], sizes = [6, 32], strides = [1, 1]} : vector<12x32xf32> to vector<6x32xf32>
    %13 = arith.addf %12, %3 : vector<6x32xf32>
    %c9 = arith.constant 9 : index
    %c0_14 = arith.constant 0 : index
    %14 = vector.load %arg11[%c9, %c0_14] : memref<16x32xf32, #tpu.memory_space<vmem>>, vector<6x32xf32>
    tpu.vector_store %arg11[%c9, %c0_14], %13 {strides = array<i32>} : memref<16x32xf32, #tpu.memory_space<vmem>>, vector<6x32xf32>,
    %c15 = arith.constant 15 : index
    %c0_15 = arith.constant 0 : index
    %15 = vector.load %arg11[%c15, %c0_15] : memref<16x32xf32, #tpu.memory_space<vmem>>, vector<1x32xf32>
    tpu.vector_store %arg11[%c15, %c0_15], %5 {strides = array<i32>} : memref<16x32xf32, #tpu.memory_space<vmem>>, vector<1x32xf32>,
    %c0_16 = arith.constant 0 : index
    %c0_17 = arith.constant 0 : index
    %16 = vector.load %arg2[%c0_16, %c0_17] : memref<16x1xi32, #tpu.memory_space<vmem>>, vector<16x1xi32>
    %c0_18 = arith.constant 0 : index
    %c0_19 = arith.constant 0 : index
    %17 = vector.load %arg7[%c0_18, %c0_19] : memref<2x32xf32, #tpu.memory_space<vmem>>, vector<1x32xf32>
    %18 = vector.shape_cast %17 : vector<1x32xf32> to vector<1x32xf32>
    %19 = vector.broadcast %18 : vector<1x32xf32> to vector<16x32xf32>
    %c1_20 = arith.constant 1 : index
    %c0_21 = arith.constant 0 : index
    %20 = vector.load %arg7[%c1_20, %c0_21] : memref<2x32xf32, #tpu.memory_space<vmem>>, vector<1x32xf32>
    %21 = vector.shape_cast %20 : vector<1x32xf32> to vector<1x32xf32>
    %22 = vector.broadcast %21 : vector<1x32xf32> to vector<16x32xf32>
    %c0_i32 = arith.constant 0 : i32
    %23 = vector.broadcast %c0_i32 : i32 to vector<16x1xi32>
    %24 = arith.cmpi eq, %16, %23 : vector<16x1xi32>
    %25 = vector.shape_cast %24 : vector<16x1xi1> to vector<16x1xi1>
    %26 = vector.broadcast %25 : vector<16x1xi1> to vector<16x32xi1>
    %27 = arith.select %26, %19, %22 : vector<16x32xi1>, vector<16x32xf32>
    %c0_22 = arith.constant 0 : index
    %c0_23 = arith.constant 0 : index
    %28 = vector.load %arg11[%c0_22, %c0_23] : memref<16x32xf32, #tpu.memory_space<vmem>>, vector<16x32xf32>
    %29 = arith.addf %28, %27 : vector<16x32xf32>
    %cst_24 = arith.constant dense<0.000000e+00> : vector<16xf32>
    %30 = vector.multi_reduction <add>, %29, %cst_24 [1] : vector<16x32xf32> to vector<16xf32>
    %31 = vector.shape_cast %30 : vector<16xf32> to vector<16x1xf32>
    %cst_25 = arith.constant 3.200000e+01 : f32
    %32 = vector.broadcast %cst_25 : f32 to vector<16x1xf32>
    %33 = arith.divf %31, %32 : vector<16x1xf32>
    %34 = vector.broadcast %33 : vector<16x1xf32> to vector<16x32xf32>
    %35 = arith.subf %29, %34 : vector<16x32xf32>
    %36 = arith.mulf %35, %35 : vector<16x32xf32>
    %cst_26 = arith.constant dense<0.000000e+00> : vector<16xf32>
    %37 = vector.multi_reduction <add>, %36, %cst_26 [1] : vector<16x32xf32> to vector<16xf32>
    %38 = vector.shape_cast %37 : vector<16xf32> to vector<16x1xf32>
    %cst_27 = arith.constant 3.200000e+01 : f32
    %39 = vector.broadcast %cst_27 : f32 to vector<16x1xf32>
    %40 = arith.divf %38, %39 : vector<16x1xf32>
    %cst_28 = arith.constant 9.99999996E-13 : f32
    %41 = vector.broadcast %cst_28 : f32 to vector<16x1xf32>
    %42 = arith.addf %40, %41 : vector<16x1xf32>
    %43 = math.rsqrt %42 : vector<16x1xf32>
    %44 = vector.broadcast %43 : vector<16x1xf32> to vector<16x32xf32>
    %45 = arith.mulf %35, %44 : vector<16x32xf32>
    %c0_29 = arith.constant 0 : index
    %c0_30 = arith.constant 0 : index
    %46 = vector.load %arg8[%c0_29, %c0_30] : memref<1x32xf32, #tpu.memory_space<vmem>>, vector<1x32xf32>
    %47 = vector.broadcast %46 : vector<1x32xf32> to vector<16x32xf32>
    %48 = arith.mulf %45, %47 : vector<16x32xf32>
    %c0_31 = arith.constant 0 : index
    %c0_32 = arith.constant 0 : index
    %49 = vector.load %arg9[%c0_31, %c0_32] : memref<1x32xf32, #tpu.memory_space<vmem>>, vector<1x32xf32>
    %50 = vector.broadcast %49 : vector<1x32xf32> to vector<16x32xf32>
    %51 = arith.addf %48, %50 : vector<16x32xf32>
    %c0_33 = arith.constant 0 : index
    %c0_34 = arith.constant 0 : index
    %52 = vector.load %arg10[%c0_33, %c0_34] : memref<16x32xf32, #tpu.memory_space<vmem>>, vector<16x32xf32>
    tpu.vector_store %arg10[%c0_33, %c0_34], %51 {strides = array<i32>} : memref<16x32xf32, #tpu.memory_space<vmem>>, vector<16x32xf32>,
    return
  }
  func.func @transform_0(%arg0: i32) -> (i32, i32) {
    %c0_i32 = arith.constant 0 : i32
    %c0_i32_0 = arith.constant 0 : i32
    return %arg0, %c0_i32 : i32, i32
  }
  func.func @transform_1(%arg0: i32) -> (i32, i32) {
    %c0_i32 = arith.constant 0 : i32
    %c0_i32_0 = arith.constant 0 : i32
    return %arg0, %c0_i32 : i32, i32
  }
  func.func @transform_2(%arg0: i32) -> (i32, i32) {
    %c0_i32 = arith.constant 0 : i32
    %c0_i32_0 = arith.constant 0 : i32
    %c0_i32_1 = arith.constant 0 : i32
    return %c0_i32, %c0_i32_0 : i32, i32
  }
  func.func @transform_3(%arg0: i32) -> (i32, i32) {
    %c0_i32 = arith.constant 0 : i32
    %c0_i32_0 = arith.constant 0 : i32
    %c0_i32_1 = arith.constant 0 : i32
    return %c0_i32, %c0_i32_0 : i32, i32
  }
  func.func @transform_4(%arg0: i32) -> (i32, i32) {
    %c0_i32 = arith.constant 0 : i32
    %c0_i32_0 = arith.constant 0 : i32
    %c0_i32_1 = arith.constant 0 : i32
    return %c0_i32, %c0_i32_0 : i32, i32
  }
  func.func @transform_5(%arg0: i32) -> (i32, i32) {
    %c0_i32 = arith.constant 0 : i32
    %c0_i32_0 = arith.constant 0 : i32
    %c0_i32_1 = arith.constant 0 : i32
    return %c0_i32, %c0_i32_0 : i32, i32
  }
  func.func @transform_6(%arg0: i32) -> (i32, i32) {
    %c0_i32 = arith.constant 0 : i32
    %c0_i32_0 = arith.constant 0 : i32
    %c0_i32_1 = arith.constant 0 : i32
    return %c0_i32, %c0_i32_0 : i32, i32
  }
  func.func @transform_7(%arg0: i32) -> (i32, i32) {
    %c0_i32 = arith.constant 0 : i32
    %c0_i32_0 = arith.constant 0 : i32
    %c0_i32_1 = arith.constant 0 : i32
    return %c0_i32, %c0_i32_0 : i32, i32
  }
  func.func @transform_8(%arg0: i32) -> (i32, i32) {
    %c0_i32 = arith.constant 0 : i32
    %c0_i32_0 = arith.constant 0 : i32
    %c0_i32_1 = arith.constant 0 : i32
    return %c0_i32, %c0_i32_0 : i32, i32
  }
  func.func @transform_9(%arg0: i32) -> (i32, i32) {
    %c0_i32 = arith.constant 0 : i32
    %c0_i32_0 = arith.constant 0 : i32
    return %arg0, %c0_i32 : i32, i32
  }
}

</mosaic_0001>

<llo_original>
// kernel: tpu_custom_call.1
$region0: #{tpu_custom_call.1}
  #allocation0 [shape = 'u32[]', space=smem, size = 0x4, offset = 0x4, fixed_abs, tag = 'smem constant byte address 0x4 - core index']
  #allocation1 [shape = 'u32[72,128]{1,0:T(1,128)}', space=vmem, size = 0x9000, scoped, tag = 'internal scratch']
  #allocation2 [shape = 'f32[16,32]{1,0:T(8,128)}', space=vmem, size = 0x2000, scoped, tag = 'scratch operand']
  %s0 = inlined_call_operand.vmem [shape: f32[12,64], index: 0, kind: input, shape index: {}]
  %s1 = inlined_call_operand.vmem [shape: s32[16,1], index: 1, kind: input, shape index: {}]
  %s2 = inlined_call_operand.vmem [shape: f32[64,32], index: 2, kind: input, shape index: {}]
  %s3 = inlined_call_operand.vmem [shape: f32[6,32], index: 3, kind: input, shape index: {}]
  %s4 = inlined_call_operand.vmem [shape: f32[1,32], index: 4, kind: input, shape index: {}]
  %s5 = inlined_call_operand.vmem [shape: f32[1,32], index: 5, kind: input, shape index: {}]
  %s6 = inlined_call_operand.vmem [shape: f32[2,32], index: 6, kind: input, shape index: {}]
  %s7 = inlined_call_operand.vmem [shape: f32[1,32], index: 7, kind: input, shape index: {}]
  %s8 = inlined_call_operand.vmem [shape: f32[1,32], index: 8, kind: input, shape index: {}]
  %s9 = inlined_call_operand.hbm [shape: f32[16,32], index: 9, kind: output, shape index: {}]
  %s10 = sld [smem:[#allocation0]]
  $region46: #{tpu_custom_call.1} parent=0
    _
  %s12 = ssub.s32 1, %s10
  %s13 = scalar_select 0, %s12, %s10
  $region1: #{tpu_custom_call.1} parent=0
    #allocation3 [shape = 'u8[8192]{0}', space=vmem, size = 0x2000, scoped, tag = 'output window, operand 0, single buffered']
    #allocation4 [shape = 's32[1]{0}', space=sflag, size = 0x4, scoped, tag = 'scoped memory for tpu_custom_call.1']
    %14 = vsyncpa [#allocation4], 0
    // Predicated region
    $region2: #{tpu_custom_call.1} parent=1 // pred_check
      _
    $region3: #{tpu_custom_call.1} parent=1 // pred_check_branch
      %16 = sbr.rel (0) target = $region5
    $region4: #{tpu_custom_call.1} parent=1 // pred_region
      _
    $region5: #{tpu_custom_call.1} parent=1 // pred_fallthru
      _
    // Predicated region
    $region6: #{tpu_custom_call.1} parent=1 // pred_check
      _
    $region7: #{tpu_custom_call.1} parent=1 // pred_check_branch
      %18 = sbr.rel (0) target = $region9
    $region8: #{tpu_custom_call.1} parent=1 // pred_region
      _
    $region9: #{tpu_custom_call.1} parent=1 // pred_fallthru
      _
    // Predicated region
    $region10: #{tpu_custom_call.1} parent=1 // pred_check
      _
    $region11: #{tpu_custom_call.1} parent=1 // pred_check_branch
      %20 = sbr.rel (0) target = $region13
    $region12: #{tpu_custom_call.1} parent=1 // pred_region
      _
    $region13: #{tpu_custom_call.1} parent=1 // pred_fallthru
      _
    // Predicated region
    $region14: #{tpu_custom_call.1} parent=1 // pred_check
      _
    $region15: #{tpu_custom_call.1} parent=1 // pred_check_branch
      %22 = sbr.rel (0) target = $region17
    $region16: #{tpu_custom_call.1} parent=1 // pred_region
      _
    $region17: #{tpu_custom_call.1} parent=1 // pred_fallthru
      _
    // Predicated region
    $region18: #{tpu_custom_call.1} parent=1 // pred_check
      _
    $region19: #{tpu_custom_call.1} parent=1 // pred_check_branch
      %24 = sbr.rel (0) target = $region21
    $region20: #{tpu_custom_call.1} parent=1 // pred_region
      _
    $region21: #{tpu_custom_call.1} parent=1 // pred_fallthru
      _
    // Predicated region
    $region22: #{tpu_custom_call.1} parent=1 // pred_check
      _
    $region23: #{tpu_custom_call.1} parent=1 // pred_check_branch
      %26 = sbr.rel (0) target = $region25
    $region24: #{tpu_custom_call.1} parent=1 // pred_region
      _
    $region25: #{tpu_custom_call.1} parent=1 // pred_fallthru
      _
    // Predicated region
    $region26: #{tpu_custom_call.1} parent=1 // pred_check
      _
    $region27: #{tpu_custom_call.1} parent=1 // pred_check_branch
      %28 = sbr.rel (0) target = $region29
    $region28: #{tpu_custom_call.1} parent=1 // pred_region
      _
    $region29: #{tpu_custom_call.1} parent=1 // pred_fallthru
      _
    // Predicated region
    $region30: #{tpu_custom_call.1} parent=1 // pred_check
      _
    $region31: #{tpu_custom_call.1} parent=1 // pred_check_branch
      %30 = sbr.rel (0) target = $region33
    $region32: #{tpu_custom_call.1} parent=1 // pred_region
      _
    $region33: #{tpu_custom_call.1} parent=1 // pred_fallthru
      _
    // Predicated region
    $region34: #{tpu_custom_call.1} parent=1 // pred_check
      _
    $region35: #{tpu_custom_call.1} parent=1 // pred_check_branch
      %32 = sbr.rel (0) target = $region37
    $region36: #{tpu_custom_call.1} parent=1 // pred_region
      _
    $region37: #{tpu_custom_call.1} parent=1 // pred_fallthru
      _
    %v33 = vld [vmem:[%s0] sm:$0xff]
    %v34 = vld [vmem:[%s0 + $0x8] sm:$0xf]
    %v35 = vld [vmem:[%s2] sm:$0xff]
    %v36 = vld [vmem:[%s2 + $0x8] sm:$0xff]
    %v37 = vld [vmem:[%s2 + $0x10] sm:$0xff]
    %v38 = vld [vmem:[%s2 + $0x18] sm:$0xff]
    %v39 = vld [vmem:[%s2 + $0x20] sm:$0xff]
    %v40 = vld [vmem:[%s2 + $0x28] sm:$0xff]
    %v41 = vld [vmem:[%s2 + $0x30] sm:$0xff]
    %v42 = vld [vmem:[%s2 + $0x38] sm:$0xff]
    %vm43 = vcmask 523264
    %v45 = vsel %vm43, %v33, 0
    %v48 = vsel %vm43, %v34, 0
    %50 = vmatpush.msra.mxu0 0.0
    %51 = vmatpush.msra.mxu0 0.0
    %52 = vmatpush.msra.mxu0 0.0
    %53 = vmatpush.msra.mxu0 0.0
    %54 = vmatpush.msra.mxu0 0.0
    %55 = vmatpush.msra.mxu0 0.0
    %56 = vmatpush.msra.mxu0 0.0
    %57 = vmatpush.msra.mxu0 0.0
    %58 = vmatpush.msra.mxu0 %v42
    %59 = vmatpush.msra.mxu0 %v41
    %60 = vmatpush.msra.mxu0 %v40
    %61 = vmatpush.msra.mxu0 %v39
    %62 = vmatpush.msra.mxu0 %v38
    %63 = vmatpush.msra.mxu0 %v37
    %64 = vmatpush.msra.mxu0 %v36
    %65 = vmatpush.msra.mxu0 %v35
    %66 = vmatmul.f32.gmra.mxu0 %v45
    %v67 = vpop.f32.mrf.mxu0
    %v68 = vadd.f32 0.0, %v67
    %69 = vmatmul.f32.gmra.mxu0 %v48
    %v70 = vpop.f32.mrf.mxu0
    %v71 = vadd.f32 0.0, %v70
    %72 = vdwg.mxu0
    %v73 = vld [vmem:[%s3] sm:$0x3f]
    %v74 = vld [vmem:[%s4] sm:$0x1]
    %v75 = vld [vmem:[%s5] sm:$0x1]
    %vm76 = vcmask 253952
    %77 = vst.msk [vmem:[#allocation2] sm:$0x1] %vm76, %v74
    %v78 = vadd.f32 %v68, %v73
    %vm79 = vcmask 259072
    %80 = vst.msk [vmem:[#allocation2 + $0x1] sm:$0x3f] %vm79, %v78
    %81 = vst.msk [vmem:[#allocation2 + $0x7] sm:$0x1] %vm76, %v75
    %82 = vst.msk [vmem:[#allocation2 + $0x8] sm:$0x1] %vm76, %v74
    %v84 = vrot.slane %v73, 2
    %v86 = vadd.f32 %v68, %v84
    %v87 = vadd.f32 %v71, %v84
    %vm88 = vcmask 261126
    %89 = vst.msk [vmem:[#allocation2 + $0x3] sm:$0xc0] %vm88, %v86
    %vm90 = vcmask 257024
    %91 = vst.msk [vmem:[#allocation2 + $0xb] sm:$0xf] %vm90, %v87
    %92 = vst.msk [vmem:[#allocation2 + $0xf] sm:$0x1] %vm76, %v75
    %v93 = vld [vmem:[%s1] sm:$0xff]
    %v94 = vld [vmem:[%s1 + $0x8] sm:$0xff]
    %v95 = vld [vmem:[%s6] sm:$0x1]
    %v96 = vperm.slane %v95, 0
    %v97 = vld [vmem:[%s6 + $0x1] sm:$0x1]
    %v98 = vperm.slane %v97, 0
    %vm99 = vcmp.eq.s32.totalorder %v93, 0
    %vm100 = vcmp.eq.s32.totalorder %v94, 0
    %v101 = vsel %vm99, 1, 0
    %v102 = vsel %vm100, 1, 0
    %103 = vset.pattern.permute.xlu0 0
    %104 = vperm.xlu0 %103, %v101
    %v105 = vpop.permute.xlu0 %104
    %106 = vset.pattern.permute.xlu0 0
    %107 = vperm.xlu0 %106, %v102
    %v108 = vpop.permute.xlu0 %107
    %vm109 = vcmp.eq.s32.totalorder %v105, 1
    %vm110 = vcmp.eq.s32.totalorder %v108, 1
    %v111 = vsel %vm109, %v96, %v98
    %v112 = vsel %vm110, %v96, %v98
    %v113 = vld [vmem:[#allocation2] sm:$0xff]
    %v114 = vld [vmem:[#allocation2 + $0x8] sm:$0xff]
    %v115 = vadd.f32 %v113, %v111
    %v116 = vadd.f32 %v114, %v112
    %vm117 = vcmask 261120
    %v118 = vsel %vm117, %v115, 0.0
    %119 = vadd.xlane.f32.xlu0 %v118
    %v120 = vpop.xlane.xlu0 %119
    %v121 = vsel %vm117, %v116, 0.0
    %122 = vadd.xlane.f32.xlu0 %v121
    %v123 = vpop.xlane.xlu0 %122
    %v124 = vrcp.pop 32.0
    %v125 = vmul.f32 32.0, %v124
    %v126 = vsub.f32 1.0, %v125
    %v127 = vmul.f32 %v124, %v126
    %v128 = vadd.f32 %v124, %v127
    %vm129 = vweird.f32 %v124
    %v130 = vsel %vm129, %v124, %v128
    %v131 = vmul.f32 %v120, %v130
    %v132 = vmul.f32 %v123, %v130
    %v133 = vsub.f32 %v115, %v131
    %v134 = vsub.f32 %v116, %v132
    %v135 = vmul.f32 %v133, %v133
    %v136 = vmul.f32 %v134, %v134
    %v137 = vsel %vm117, %v135, 0.0
    %138 = vadd.xlane.f32.xlu0 %v137
    %v139 = vpop.xlane.xlu0 %138
    %v140 = vsel %vm117, %v136, 0.0
    %141 = vadd.xlane.f32.xlu0 %v140
    %v142 = vpop.xlane.xlu0 %141
    %v143 = vmul.f32 %v139, %v130
    %v144 = vmul.f32 %v142, %v130
    %v145 = vadd.f32 %v143, 1e-12
    %v146 = vadd.f32 %v144, 1e-12
    %v147 = vrsqrt.pop %v145
    %v148 = vmul.f32 %v147, %v145
    %v149 = vmul.f32 %v148, %v147
    %v150 = vmul.f32 0.5, %v149
    %v151 = vsub.f32 1.5, %v150
    %v152 = vmul.f32 %v147, %v151
    %vm153 = vweird.f32 %v145
    %vm154 = vweird.f32 %v147
    %vm155 = vmor %vm153, %vm154
    %v156 = vsel %vm155, %v147, %v152
    %v157 = vrsqrt.pop %v146
    %v158 = vmul.f32 %v157, %v146
    %v159 = vmul.f32 %v158, %v157
    %v160 = vmul.f32 0.5, %v159
    %v161 = vsub.f32 1.5, %v160
    %v162 = vmul.f32 %v157, %v161
    %vm163 = vweird.f32 %v146
    %vm164 = vweird.f32 %v157
    %vm165 = vmor %vm163, %vm164
    %v166 = vsel %vm165, %v157, %v162
    %v167 = vmul.f32 %v133, %v156
    %v168 = vmul.f32 %v134, %v166
    %v169 = vld [vmem:[%s7] sm:$0x1]
    %v171 = vperm.slane %v169, 0
    %v173 = vmul.f32 %v167, %v171
    %v174 = vmul.f32 %v168, %v171
    %v175 = vld [vmem:[%s8] sm:$0x1]
    %v177 = vperm.slane %v175, 0
    %v179 = vadd.f32 %v173, %v177
    %v180 = vadd.f32 %v174, %v177
    %181 = vst.msk [vmem:[#allocation3] sm:$0xff] %vm117, %v179
    %182 = vst.msk [vmem:[#allocation3 + $0x8] sm:$0xff] %vm117, %v180
    // Predicated region
    $region38: #{tpu_custom_call.1} parent=1 // pred_check
      _
    $region39: #{tpu_custom_call.1} parent=1 // pred_check_branch
      %184 = sbr.rel (0) target = $region41
    $region40: #{tpu_custom_call.1} parent=1 // pred_region
      %186 = vsyncadd [#allocation4], 0
      %s187 = sshll.u32 [#allocation3], 4
      %s188 = int_to_ptr.vmem [resolvable:$true] %s187
      %s189 = sshll.u32 %s9, 4
      %s190 = int_to_ptr.hbm [resolvable:$true] %s189
      %195 = dma.vmem_to_hbm [thread:$0]  %s188, 256, %s190, [#allocation4], 128, 128, 8
    $region41: #{tpu_custom_call.1} parent=1 // pred_fallthru
      _
    // Predicated region
    $region42: #{tpu_custom_call.1} parent=1 // pred_check
      _
    $region43: #{tpu_custom_call.1} parent=1 // pred_check_branch
      %197 = sbr.rel (0) target = $region45
    $region44: #{tpu_custom_call.1} parent=1 // pred_region
      %199 = dma.done [#allocation4], 256
    $region45: #{tpu_custom_call.1} parent=1 // pred_fallthru
      _
    %200 = vsyncpa [#allocation4], 1

</llo_original>
